<compile_context>
chip_gen: v5e
topology: v5e:2x2
jax: 0.10.0
libtpu: 0.0.40
codegen_flags: <defaults>
</compile_context>

<pallas_src>
import functools
import math

import jax
import jax.numpy as jnp
from jax.experimental import pallas as pl
from jax.experimental.pallas import tpu as pltpu

F32 = jnp.float32
NEG = -1e30


# --------------------------------------------------------------------------- #
# In-kernel helpers (operate on traced values, not refs)
# --------------------------------------------------------------------------- #
def _ln(x, w, b, eps=1e-5):
    mu = jnp.mean(x, axis=-1, keepdims=True)
    var = jnp.mean((x - mu) ** 2, axis=-1, keepdims=True)
    return (x - mu) * jax.lax.rsqrt(var + eps) * w + b


def _mha_block(x_q, x_kv, mask, w_qkv, b_qkv, wo, bo, num_heads, self_attn):
    """Whole-batch multi-head attention.

    x_q: (N, Lq, D), x_kv: (N, Lk, D), mask: (N, 1, Lk) with 1.0 == masked.
    w_qkv: (D, 3D) fused projection (q | k | v), b_qkv: (1, 3D).
    The output projection is applied per head via row slices of wo, summed into
    one accumulator -> no lane-axis concat of heads.
    """
    N, Lq, D = x_q.shape
    Lk = x_kv.shape[1]
    hd = D // num_heads
    if self_attn:
        qkv = jnp.dot(x_q.reshape(N * Lq, D), w_qkv,
                      preferred_element_type=F32) + b_qkv
        qkv = qkv.reshape(N, Lq, 3 * D)
        q = qkv[..., :D]
        k = qkv[..., D:2 * D]
        v = qkv[..., 2 * D:]
    else:
        q = (jnp.dot(x_q.reshape(N * Lq, D), w_qkv[:, :D],
                     preferred_element_type=F32)
             + b_qkv[:, :D]).reshape(N, Lq, D)
        kv = (jnp.dot(x_kv.reshape(N * Lk, D), w_qkv[:, D:],
                      preferred_element_type=F32)
              + b_qkv[:, D:]).reshape(N, Lk, 2 * D)
        k = kv[..., :D]
        v = kv[..., D:]
    scale = 1.0 / math.sqrt(hd)
    acc = jnp.zeros((N * Lq, D), F32)
    for h in range(num_heads):                       # static unroll (5 heads)
        sl = slice(h * hd, (h + 1) * hd)
        s = jnp.einsum('bqd,bkd->bqk', q[..., sl], k[..., sl],
                       preferred_element_type=F32) * scale
        s = jnp.where(mask > 0.5, NEG, s)
        s = s - jnp.max(s, axis=-1, keepdims=True)
        p = jnp.exp(s)
        p = p / jnp.sum(p, axis=-1, keepdims=True)
        ctx = jnp.einsum('bqk,bkd->bqd', p, v[..., sl],
                         preferred_element_type=F32)
        acc = acc + jnp.dot(ctx.reshape(N * Lq, hd), wo[sl, :],
                            preferred_element_type=F32)
    return acc.reshape(N, Lq, D) + bo


# --------------------------------------------------------------------------- #
# 1) Image encoder: patch MLP + ReLU + patch-gate softmax (fused scorer).
# --------------------------------------------------------------------------- #
def _img_enc_kernel(x_ref, w1_ref, b1_ref, w2_ref, b2_ref, wpv_ref, bpv_ref,
                    v_ref, pv_ref, *, lam):
    x = x_ref[...]                                   # (N, K, Cin)
    N, K, C = x.shape
    D = w2_ref.shape[1]
    h = jnp.maximum(
        jnp.dot(x.reshape(N * K, C), w1_ref[...],
                preferred_element_type=F32) + b1_ref[...], 0.0)
    v2 = jnp.dot(h, w2_ref[...], preferred_element_type=F32) + b2_ref[...]
    v = v2.reshape(N, K, D)
    v_ref[...] = v
    logit = (jnp.sum(v * wpv_ref[...], axis=-1) + bpv_ref[...]) * lam
    logit = logit - jnp.max(logit, axis=-1, keepdims=True)
    p = jnp.exp(logit)
    pv_ref[...] = p / jnp.sum(p, axis=-1, keepdims=True)


def img_encoder(imgs, params, lam):
    # TODO(synk): original ImageEncoder source unavailable; the CNN backbone is
    # omitted and a deterministic patch-MLP + patch-gate substitute is used.
    N, K, _ = imgs.shape
    D = params['img_w2'].shape[1]
    kern = functools.partial(_img_enc_kernel, lam=lam)
    return pl.pallas_call(
        kern,
        out_shape=(jax.ShapeDtypeStruct((N, K, D), F32),
                   jax.ShapeDtypeStruct((N, K), F32)),
    )(imgs.astype(F32), params['img_w1'], params['img_b1'],
      params['img_w2'], params['img_b2'], params['img_wpv'], params['img_bpv'])


# --------------------------------------------------------------------------- #
# 2) Text encoder: proj + tanh + masked token-importance softmax (one launch
#    for texts AND caption, stacked along the batch axis).
# --------------------------------------------------------------------------- #
def _txt_enc_kernel(x_ref, m_ref, wp_ref, bp_ref, ws_ref, bs_ref,
                    te_ref, sc_ref, *, lam):
    x = x_ref[...]                                   # (B, L, Cin)
    m = m_ref[...]                                   # (B, L)
    B, L, C = x.shape
    D = wp_ref.shape[1]
    te = jnp.tanh(jnp.dot(x.reshape(B * L, C), wp_ref[...],
                          preferred_element_type=F32) + bp_ref[...])
    te = te.reshape(B, L, D)
    te_ref[...] = te
    sl = (jnp.sum(te * ws_ref[...], axis=-1) + bs_ref[...]) * lam
    sl = jnp.where(m > 0.5, NEG, sl)                 # mask after scaling
    sl = sl - jnp.max(sl, axis=-1, keepdims=True)
    p = jnp.exp(sl)
    sc_ref[...] = p / jnp.sum(p, axis=-1, keepdims=True)


def txt_encoder(t, mask, params, lam):
    # TODO(synk): original TextEncoder_without_know (RNN + word_seq aggregation)
    # unavailable; a deterministic proj + tanh + masked-softmax substitute.
    B, L, _ = t.shape
    D = params['txt_wproj'].shape[1]
    kern = functools.partial(_txt_enc_kernel, lam=lam)
    return pl.pallas_call(
        kern,
        out_shape=(jax.ShapeDtypeStruct((B, L, D), F32),
                   jax.ShapeDtypeStruct((B, L), F32)),
    )(t.astype(F32), mask.astype(F32), params['txt_wproj'],
      params['txt_bproj'], params['txt_wscore'], params['txt_bscore'])


# --------------------------------------------------------------------------- #
# 3) TextDiff: two self-attention blocks (shared weights, as in the reference
#    code) + residual + LayerNorm, all fused into a single kernel.
# --------------------------------------------------------------------------- #
def _textdiff_kernel(x_ref, m_ref, wqkv_ref, bqkv_ref, wo_ref, bo_ref,
                     ln1w_ref, ln1b_ref, ln2w_ref, ln2b_ref, o_ref,
                     *, num_heads):
    x = x_ref[...]
    m = m_ref[...]
    wqkv = wqkv_ref[...]
    bqkv = bqkv_ref[...]
    wo = wo_ref[...]
    bo = bo_ref[...]
    a1 = _mha_block(x, x, m, wqkv, bqkv, wo, bo, num_heads, True)
    x = _ln(x + a1, ln1w_ref[...], ln1b_ref[...])
    a2 = _mha_block(x, x, m, wqkv, bqkv, wo, bo, num_heads, True)
    o_ref[...] = _ln(x + a2, ln2w_ref[...], ln2b_ref[...])


def textdiff(x, mask, params, num_heads):
    N, L, D = x.shape
    m3 = mask.reshape(N, 1, L).astype(F32)
    p = params['td_mha']
    kern = functools.partial(_textdiff_kernel, num_heads=num_heads)
    return pl.pallas_call(
        kern, out_shape=jax.ShapeDtypeStruct((N, L, D), F32),
    )(x, m3, p['wqkv'], p['bqkv'], p['wo'], p['bo'],
      params['td_ln1w'], params['td_ln1b'],
      params['td_ln2w'], params['td_ln2b'])


# --------------------------------------------------------------------------- #
# 4) GRU (num_layers=1, batch_first) -> final hidden state (N, H).
#    Input projection hoisted out of the serial time loop; per-gate weights
#    (leading-axis indexed) keep every gate a clean, lane-aligned block.
# --------------------------------------------------------------------------- #
def _gru_kernel(x_ref, wih_ref, whh_ref, bih_ref, bhh_ref, h_ref):
    x = x_ref[...]                                   # (N, L, D)
    N, L, D = x.shape
    H = whh_ref.shape[1]
    x2 = x.reshape(N * L, D)
    gi_r = (jnp.dot(x2, wih_ref[0], preferred_element_type=F32)
            + bih_ref[0]).reshape(N, L, H)
    gi_z = (jnp.dot(x2, wih_ref[1], preferred_element_type=F32)
            + bih_ref[1]).reshape(N, L, H)
    gi_n = (jnp.dot(x2, wih_ref[2], preferred_element_type=F32)
            + bih_ref[2]).reshape(N, L, H)
    whr, whz, whn = whh_ref[0], whh_ref[1], whh_ref[2]
    bhr, bhz, bhn = bhh_ref[0], bhh_ref[1], bhh_ref[2]
    h = jnp.zeros((N, H), F32)
    for t in range(L):                               # static unroll, L is small
        gh_r = jnp.dot(h, whr, preferred_element_type=F32) + bhr
        gh_z = jnp.dot(h, whz, preferred_element_type=F32) + bhz
        gh_n = jnp.dot(h, whn, preferred_element_type=F32) + bhn
        r = jax.nn.sigmoid(gi_r[:, t, :] + gh_r)
        z = jax.nn.sigmoid(gi_z[:, t, :] + gh_z)
        n = jnp.tanh(gi_n[:, t, :] + r * gh_n)
        h = (1.0 - z) * n + z * h
    h_ref[...] = h


def gru(x, params):
    N = x.shape[0]
    H = params['gru_whh'].shape[1]
    return pl.pallas_call(
        _gru_kernel, out_shape=jax.ShapeDtypeStruct((N, H), F32),
    )(x, params['gru_wih'], params['gru_whh'], params['gru_bih'],
      params['gru_bhh'])


# --------------------------------------------------------------------------- #
# 5) CroModality: both cross-attention branches (+FFN +LN) fused in a single
#    kernel.  Branch weights are stacked on a leading axis:
#      index 0 = image branch (query = images, kv = texts)
#      index 1 = text branch  (query = texts,  kv = images)
# --------------------------------------------------------------------------- #
def _cromod_kernel(v_ref, t_ref, mt_ref, mi_ref, wqkv_ref, bqkv_ref, wo_ref,
                   bo_ref, ln1w_ref, ln1b_ref, w1_ref, b1_ref, w2_ref, b2_ref,
                   ln2w_ref, ln2b_ref, oi_ref, ot_ref, *, num_heads):
    v = v_ref[...]
    t = t_ref[...]

    def branch(xq, xkv, mask, i, out_ref):
        att = _mha_block(xq, xkv, mask, wqkv_ref[i], bqkv_ref[i],
                         wo_ref[i], bo_ref[i], num_heads, False)
        hh = _ln(xq + att, ln1w_ref[i], ln1b_ref[i])
        B, Lq, D = xq.shape
        ff = jnp.maximum(
            jnp.dot(hh.reshape(B * Lq, D), w1_ref[i],
                    preferred_element_type=F32) + b1_ref[i], 0.0)
        ff = jnp.dot(ff, w2_ref[i], preferred_element_type=F32) + b2_ref[i]
        out_ref[...] = _ln(hh + ff.reshape(B, Lq, D),
                           ln2w_ref[i], ln2b_ref[i])

    branch(v, t, mt_ref[...], 0, oi_ref)
    branch(t, v, mi_ref[...], 1, ot_ref)


def cromodality(v, t, mask_txt, mask_img, params, num_heads):
    # TODO(synk): exact CroModality definition unavailable; one cross-attn +
    # FFN block per modality is used.
    N, K, D = v.shape
    L = t.shape[1]
    mt = mask_txt.reshape(N, 1, L).astype(F32)
    mi = mask_img.reshape(N, 1, K).astype(F32)
    kern = functools.partial(_cromod_kernel, num_heads=num_heads)
    return pl.pallas_call(
        kern,
        out_shape=(jax.ShapeDtypeStruct((N, K, D), F32),
                   jax.ShapeDtypeStruct((N, L, D), F32)),
    )(v, t, mt, mi, params['cm_wqkv'], params['cm_bqkv'], params['cm_wo'],
      params['cm_bo'], params['cm_ln1w'], params['cm_ln1b'], params['cm_w1'],
      params['cm_b1'], params['cm_w2'], params['cm_b2'], params['cm_ln2w'],
      params['cm_ln2b'])


# --------------------------------------------------------------------------- #
# 6/7) GAT stack: all layers of one modality fused in a single kernel.
#      Grid over batch marked 'parallel' (lets v7x shard over both TCs).
#      Standard dense GATConv semantics (concat=False => head mean), ReLU +
#      shared LayerNorm after every layer, exactly as used inside Alignment.
#      If append_c=True, the row  c = sum(score * t2)  is appended -> (L+1, D).
# --------------------------------------------------------------------------- #
def _gat_stack_kernel(x_ref, adj_ref, gm_ref, sc_ref, w_ref, asrc_ref,
                      adst_ref, bias_ref, lnw_ref, lnb_ref, o_ref,
                      *, layers, heads, append_c):
    x0 = x_ref[0]                     # (L, D)
    adj = adj_ref[0]                  # (L, L)  adj[i, j] = 1 iff edge j -> i
    gm = gm_ref[0]                    # (1, 1)  1.0 == graph masked
    lnw = lnw_ref[...]
    lnb = lnb_ref[...]
    L, D = x0.shape
    edge = jnp.where(adj > 0.5, 1.0, 0.0)
    inv_heads = 1.0 / heads
    x = x0
    for l in range(layers):
        acc = jnp.zeros((L, D), F32)
        sacc = jnp.zeros((L, D), F32)
        for h in range(heads):
            idx = l * heads + h                       # static leading index
            xwh = jnp.dot(x, w_ref[idx], preferred_element_type=F32)  # (L, D)
            # attention scores: src as a row vector, dst as a column vector,
            # both produced directly on the MXU (no in-kernel transposes).
            s_src = jax.lax.dot_general(asrc_ref[idx], xwh,
                                        (((1,), (1,)), ((), ())),
                                        preferred_element_type=F32)   # (1, L)
            s_dst = jax.lax.dot_general(xwh, adst_ref[idx],
                                        (((1,), (1,)), ((), ())),
                                        preferred_element_type=F32)   # (L, 1)
            e = s_dst + s_src                                         # (L, L)
            e = jnp.where(e > 0, e, 0.2 * e)                          # LeakyReLU
            e = jnp.where(adj > 0.5, e, NEG)
            e = e - jnp.max(e, axis=-1, keepdims=True)
            p = jnp.exp(e) * edge
            denom = jnp.maximum(jnp.sum(p, axis=-1, keepdims=True), 1e-20)
            alpha = p / denom
            acc = acc + jnp.dot(alpha, xwh, preferred_element_type=F32)
            sacc = sacc + xwh
        out = acc * inv_heads + bias_ref[l]
        sout = sacc * inv_heads + bias_ref[l]
        # TODO(synk): custom tg_conv.GATConv (is_text / fill_value='mean' /
        # mask kw) source unavailable; masked graphs fall back to the head-mean
        # self transform.
        out = jnp.where(gm > 0.5, sout, out)
        out = jnp.maximum(out, 0.0)                                   # ReLU
        x = _ln(out, lnw, lnb)
    if append_c:
        c = jnp.sum(sc_ref[0] * x0, axis=0, keepdims=True)            # (1, D)
        x = jnp.concatenate([x, c], axis=0)                           # (L+1, D)
    o_ref[0] = x


def gat_stack(x, adj, gnn_mask, score, wkey, params, append_c, heads):
    N, L, D = x.shape
    w = params[wkey + '_w']
    lh = w.shape[0]
    layers = lh // heads
    Lout = L + 1 if append_c else L
    gm = gnn_mask.reshape(N, 1, 1).astype(F32)
    kern = functools.partial(_gat_stack_kernel, layers=layers, heads=heads,
                             append_c=append_c)
    return pl.pallas_call(
        kern,
        out_shape=jax.ShapeDtypeStruct((N, Lout, D), F32),
        grid=(N,),
        in_specs=[
            pl.BlockSpec((1, L, D), lambda b: (b, 0, 0)),
            pl.BlockSpec((1, L, L), lambda b: (b, 0, 0)),
            pl.BlockSpec((1, 1, 1), lambda b: (b, 0, 0)),
            pl.BlockSpec((1, L, 1), lambda b: (b, 0, 0)),
            pl.BlockSpec((lh, D, D), lambda b: (0, 0, 0)),
            pl.BlockSpec((lh, 1, D), lambda b: (0, 0, 0)),
            pl.BlockSpec((lh, 1, D), lambda b: (0, 0, 0)),
            pl.BlockSpec((layers, 1, D), lambda b: (0, 0, 0)),
            pl.BlockSpec((1, D), lambda b: (0, 0)),
            pl.BlockSpec((1, D), lambda b: (0, 0)),
        ],
        out_specs=pl.BlockSpec((1, Lout, D), lambda b: (b, 0, 0)),
        compiler_params=pltpu.CompilerParams(dimension_semantics=("parallel",)),
    )(x.astype(F32), adj.astype(F32), gm, score.astype(F32),
      w, params[wkey + '_asrc'], params[wkey + '_adst'],
      params[wkey + '_bias'], params['al_norm_w'], params['al_norm_b'])


# --------------------------------------------------------------------------- #
# 8) Alignment core + final classification head, fused and concat-free:
#    y = predict @ W[:2K] + (a1*pv) @ W[2K:3K] + (a2*pv) @ W[3K:] + b
# --------------------------------------------------------------------------- #
def _align_head_kernel(t2_ref, v2_ref, tnp_ref, v3_ref, kpm_ref, npm_ref,
                       w1_ref, b1_ref, w2_ref, b2_ref, pred_ref, pv_ref,
                       fw_ref, fb_ref, y_ref, *, lam):
    t2 = t2_ref[...]                  # (N, L, D)
    v2 = v2_ref[...]                  # (N, K, D)
    tnp = tnp_ref[...]                # (N, L+1, D)
    v3 = v3_ref[...]                  # (N, K, D)
    kpm = kpm_ref[...]                # (N, L, 1)
    npm = npm_ref[...]                # (N, L+1, 1)
    N, L, D = t2.shape
    K = v2.shape[1]
    inv = 1.0 / math.sqrt(D)
    q1 = jnp.einsum('nld,nkd->nlk', t2, v2, preferred_element_type=F32) * inv
    q2 = jnp.einsum('nld,nkd->nlk', tnp, v3, preferred_element_type=F32) * inv
    # linear1 / linear2 scorers fused as lane reductions; scale before masking.
    pa_t = (jnp.sum(t2 * w1_ref[...], axis=-1, keepdims=True)
            + b1_ref[...]) * lam
    pa_n = (jnp.sum(tnp * w2_ref[...], axis=-1, keepdims=True)
            + b2_ref[...]) * lam
    pa_t = jnp.where(kpm > 0.5, NEG, pa_t)
    pa_n = jnp.where(npm > 0.5, NEG, pa_n)

    def colsm(s):                     # softmax over the token axis
        s = s - jnp.max(s, axis=1, keepdims=True)
        e = jnp.exp(s)
        return e / jnp.sum(e, axis=1, keepdims=True)

    a1 = jnp.sum(q1 * colsm(pa_t), axis=1)           # (N, K)
    a2 = jnp.sum(q2 * colsm(pa_n), axis=1)           # (N, K)
    pv = pv_ref[...]                                  # (N, K)
    fw = fw_ref[...]                                  # (4K, 2)
    y = (jnp.dot(pred_ref[...], fw[:2 * K, :], preferred_element_type=F32)
         + jnp.dot(a1 * pv, fw[2 * K:3 * K, :], preferred_element_type=F32)
         + jnp.dot(a2 * pv, fw[3 * K:, :], preferred_element_type=F32)
         + fb_ref[...])
    y_ref[...] = y


def align_head(t2, v2, tnp_cat, v3, key_padding_mask, np_mask, predict, pv,
               params, lam):
    N, L, _ = t2.shape
    Lp1 = tnp_cat.shape[1]
    kpm = key_padding_mask.reshape(N, L, 1).astype(F32)
    npm = np_mask.reshape(N, Lp1, 1).astype(F32)
    kern = functools.partial(_align_head_kernel, lam=lam)
    return pl.pallas_call(
        kern, out_shape=jax.ShapeDtypeStruct((N, 2), F32),
    )(t2, v2, tnp_cat, v3, kpm, npm, params['al_w1'], params['al_b1'],
      params['al_w2'], params['al_b2'], predict, pv,
      params['final_w'], params['final_b'])


# --------------------------------------------------------------------------- #
# Full forward pass of KEHModel_without_know
# --------------------------------------------------------------------------- #
def keh_forward(params, imgs, texts, caption, mask_batch, cap_mask_batch,
                img_adj, txt_adj, gnn_mask, np_mask, lam=1.0,
                key_padding_mask_img=None, num_heads=5, gat_heads=5):
    N, K, _ = imgs.shape

    # ---- ImageEncoder (substitute) -------------------------------------------
    v, pv = img_encoder(imgs, params, lam)                   # (N,K,D), (N,K)

    # ---- TextEncoder_without_know: texts & caption in a single launch --------
    te_all, sc_all = txt_encoder(
        jnp.concatenate([texts, caption], axis=0),
        jnp.concatenate([mask_batch, cap_mask_batch], axis=0), params, lam)
    texts_e, caption_e = te_all[:N], te_all[N:]
    score = sc_all[:N]                                       # (N, L)

    # ---- TextDiff (same MHA weights used twice, as in the reference code) ----
    out = textdiff(caption_e, cap_mask_batch, params, num_heads)

    # ---- GRU -> final hidden (N, 2*img_patch) ---------------------------------
    predict = gru(out, params)

    # ---- CroModality (both branches, one kernel) ------------------------------
    if key_padding_mask_img is None:
        key_padding_mask_img = jnp.zeros((N, K), F32)
    imgs_c, txts_c = cromodality(v, texts_e, mask_batch, key_padding_mask_img,
                                 params, num_heads)

    # ---- Alignment: fused GAT stacks (text side appends the c row) ------------
    tnp_cat = gat_stack(txts_c, txt_adj, gnn_mask, score[..., None],
                        'txt_gat', params, append_c=True, heads=gat_heads)
    v3 = gat_stack(imgs_c, img_adj, jnp.zeros((N,), F32),
                   jnp.zeros((N, K, 1), F32), 'img_gat', params,
                   append_c=False, heads=gat_heads)

    # ---- Alignment core + final classification head ---------------------------
    y = align_head(txts_c, imgs_c, tnp_cat, v3, mask_batch, np_mask,
                   predict, pv, params, lam)
    return y, 0


# --------------------------------------------------------------------------- #
# Deterministic parameter init (fused / stacked layouts)
# --------------------------------------------------------------------------- #
def init_params(key, cfg):
    D = cfg['D']
    heads = cfg['heads']
    K = cfg['K']
    H = 2 * K
    layers = cfg['gat_layers']
    ks = iter(jax.random.split(key, 64))

    def w(shape, scale=0.08):
        return (scale * jax.random.normal(next(ks), shape)).astype(F32)

    def zeros(shape):
        return jnp.zeros(shape, F32)

    def ones(shape):
        return jnp.ones(shape, F32)

    p = {
        # image encoder
        'img_w1': w((cfg['img_in'], cfg['img_inter'])),
        'img_b1': zeros((1, cfg['img_inter'])),
        'img_w2': w((cfg['img_inter'], D)), 'img_b2': zeros((1, D)),
        'img_wpv': w((1, D)), 'img_bpv': zeros((1, 1)),
        # text encoder
        'txt_wproj': w((cfg['txt_in'], D)), 'txt_bproj': zeros((1, D)),
        'txt_wscore': w((1, D)), 'txt_bscore': zeros((1, 1)),
        # TextDiff (fused QKV)
        'td_mha': {'wqkv': w((D, 3 * D)), 'bqkv': zeros((1, 3 * D)),
                   'wo': w((D, D)), 'bo': zeros((1, D))},
        'td_ln1w': ones((1, D)), 'td_ln1b': zeros((1, D)),
        'td_ln2w': ones((1, D)), 'td_ln2b': zeros((1, D)),
        # GRU (per-gate, lane-aligned blocks: r, z, n)
        'gru_wih': w((3, D, H)), 'gru_whh': w((3, H, H)),
        'gru_bih': zeros((3, 1, H)), 'gru_bhh': zeros((3, 1, H)),
        # CroModality (branch 0 = image, branch 1 = text), fused QKV
        'cm_wqkv': w((2, D, 3 * D)), 'cm_bqkv': zeros((2, 1, 3 * D)),
        'cm_wo': w((2, D, D)), 'cm_bo': zeros((2, 1, D)),
        'cm_ln1w': ones((2, 1, D)), 'cm_ln1b': zeros((2, 1, D)),
        'cm_w1': w((2, D, 2 * D)), 'cm_b1': zeros((2, 1, 2 * D)),
        'cm_w2': w((2, 2 * D, D)), 'cm_b2': zeros((2, 1, D)),
        'cm_ln2w': ones((2, 1, D)), 'cm_ln2b': zeros((2, 1, D)),
        # Alignment GAT stacks (leading (layer*head) axis, no lane slicing)
        'txt_gat_w': w((layers * heads, D, D)),
        'txt_gat_asrc': w((layers * heads, 1, D)),
        'txt_gat_adst': w((layers * heads, 1, D)),
        'txt_gat_bias': zeros((layers, 1, D)),
        'img_gat_w': w((layers * heads, D, D)),
        'img_gat_asrc': w((layers * heads, 1, D)),
        'img_gat_adst': w((layers * heads, 1, D)),
        'img_gat_bias': zeros((layers, 1, D)),
        'al_w1': w((1, D)), 'al_b1': zeros((1, 1)),
        'al_w2': w((1, D)), 'al_b2': zeros((1, 1)),
        'al_norm_w': ones((1, D)), 'al_norm_b': zeros((1, D)),
        # final head: in_features = 4 * img_patch
        'final_w': w((4 * K, 2)), 'final_b': zeros((1, 2)),
    }
    return p


# --------------------------------------------------------------------------- #
if __name__ == "__main__":
    cfg = dict(N=2, L=8, K=8, D=40, txt_in=64, img_in=64, img_inter=48,
               heads=5, gat_layers=2)
    key = jax.random.PRNGKey(0)
    kp, kd = jax.random.split(key)
    params = init_params(kp, cfg)
    dks = jax.random.split(kd, 4)

    N, L, K = cfg['N'], cfg['L'], cfg['K']
    imgs = jax.random.normal(dks[0], (N, K, cfg['img_in']), F32)
    texts = jax.random.normal(dks[1], (N, L, cfg['txt_in']), F32)
    caption = jax.random.normal(dks[2], (N, L, cfg['txt_in']), F32)

    mask_batch = jnp.array([[0, 0, 0, 0, 0, 0, 0, 0],
                            [0, 0, 0, 0, 0, 0, 1, 1]], F32)
    cap_mask_batch = jnp.array([[0, 0, 0, 0, 0, 0, 0, 0],
                                [0, 0, 0, 0, 0, 1, 1, 1]], F32)
    np_mask = jnp.concatenate([mask_batch, jnp.zeros((N, 1), F32)], axis=1)
    gnn_mask = jnp.array([0.0, 0.0], F32)

    def chain_adj(n):
        idx = jnp.arange(n)
        return (jnp.abs(idx[:, None] - idx[None, :]) == 1).astype(F32)

    txt_adj = jnp.broadcast_to(chain_adj(L), (N, L, L))
    img_adj = jnp.broadcast_to(chain_adj(K), (N, K, K))

    y, _ = keh_forward(params, imgs, texts, caption, mask_batch, cap_mask_batch,
                       img_adj, txt_adj, gnn_mask, np_mask, lam=1.0,
                       num_heads=cfg['heads'], gat_heads=cfg['heads'])
    y = jax.block_until_ready(y)
    assert y.shape == (N, 2)
    assert bool(jnp.all(jnp.isfinite(y)))
    print("KERNEL_OK")
</pallas_src>

<mosaic_0001>
module attributes {stable_mosaic.version = 11 : i64} {
  func.func @_img_enc_kernel(%arg0: memref<2x8x64xf32, #tpu.memory_space<vmem>>, %arg1: memref<64x48xf32, #tpu.memory_space<vmem>>, %arg2: memref<1x48xf32, #tpu.memory_space<vmem>>, %arg3: memref<48x40xf32, #tpu.memory_space<vmem>>, %arg4: memref<1x40xf32, #tpu.memory_space<vmem>>, %arg5: memref<1x40xf32, #tpu.memory_space<vmem>>, %arg6: memref<1x1xf32, #tpu.memory_space<vmem>>, %arg7: memref<2x8x40xf32, #tpu.memory_space<vmem>>, %arg8: memref<2x8xf32, #tpu.memory_space<vmem>>) attributes {dimension_semantics = [], scalar_prefetch = 0 : i64, scratch_operands = 0 : i64, tpu.core_type = #tpu.core_type<tc>} {
    %c0 = arith.constant 0 : index
    %c0_0 = arith.constant 0 : index
    %c0_1 = arith.constant 0 : index
    %0 = vector.load %arg0[%c0, %c0_0, %c0_1] : memref<2x8x64xf32, #tpu.memory_space<vmem>>, vector<2x8x64xf32>
    %1 = vector.shape_cast %0 : vector<2x8x64xf32> to vector<16x64xf32>
    %c0_2 = arith.constant 0 : index
    %c0_3 = arith.constant 0 : index
    %2 = vector.load %arg1[%c0_2, %c0_3] : memref<64x48xf32, #tpu.memory_space<vmem>>, vector<64x48xf32>
    %cst = arith.constant dense<0.000000e+00> : vector<16x48xf32>
    %3 = tpu.matmul %1, %2, %cst {dimension_numbers = #tpu.dot_dimension_numbers<[1], [0], [0], [1], [0, 0, 1, 1], [], []>} : vector<16x64xf32>, vector<64x48xf32>, vector<16x48xf32> -> vector<16x48xf32>
    %c0_4 = arith.constant 0 : index
    %c0_5 = arith.constant 0 : index
    %4 = vector.load %arg2[%c0_4, %c0_5] : memref<1x48xf32, #tpu.memory_space<vmem>>, vector<1x48xf32>
    %5 = vector.broadcast %4 : vector<1x48xf32> to vector<16x48xf32>
    %6 = arith.addf %3, %5 : vector<16x48xf32>
    %cst_6 = arith.constant 0.000000e+00 : f32
    %7 = vector.broadcast %cst_6 : f32 to vector<16x48xf32>
    %8 = arith.maximumf %6, %7 : vector<16x48xf32>
    %c0_7 = arith.constant 0 : index
    %c0_8 = arith.constant 0 : index
    %9 = vector.load %arg3[%c0_7, %c0_8] : memref<48x40xf32, #tpu.memory_space<vmem>>, vector<48x40xf32>
    %cst_9 = arith.constant dense<0.000000e+00> : vector<16x40xf32>
    %10 = tpu.matmul %8, %9, %cst_9 {dimension_numbers = #tpu.dot_dimension_numbers<[1], [0], [0], [1], [0, 0, 1, 1], [], []>} : vector<16x48xf32>, vector<48x40xf32>, vector<16x40xf32> -> vector<16x40xf32>
    %c0_10 = arith.constant 0 : index
    %c0_11 = arith.constant 0 : index
    %11 = vector.load %arg4[%c0_10, %c0_11] : memref<1x40xf32, #tpu.memory_space<vmem>>, vector<1x40xf32>
    %12 = vector.broadcast %11 : vector<1x40xf32> to vector<16x40xf32>
    %13 = arith.addf %10, %12 : vector<16x40xf32>
    %14 = vector.shape_cast %13 : vector<16x40xf32> to vector<2x8x40xf32>
    %c0_12 = arith.constant 0 : index
    %c0_13 = arith.constant 0 : index
    %c0_14 = arith.constant 0 : index
    %15 = vector.load %arg7[%c0_12, %c0_13, %c0_14] : memref<2x8x40xf32, #tpu.memory_space<vmem>>, vector<2x8x40xf32>
    tpu.vector_store %arg7[%c0_12, %c0_13, %c0_14], %14 {strides = array<i32>} : memref<2x8x40xf32, #tpu.memory_space<vmem>>, vector<2x8x40xf32>,
    %c0_15 = arith.constant 0 : index
    %c0_16 = arith.constant 0 : index
    %16 = vector.load %arg5[%c0_15, %c0_16] : memref<1x40xf32, #tpu.memory_space<vmem>>, vector<1x40xf32>
    %17 = vector.shape_cast %16 : vector<1x40xf32> to vector<1x1x40xf32>
    %18 = vector.broadcast %17 : vector<1x1x40xf32> to vector<2x8x40xf32>
    %19 = arith.mulf %14, %18 : vector<2x8x40xf32>
    %cst_17 = arith.constant dense<0.000000e+00> : vector<2x8xf32>
    %20 = vector.multi_reduction <add>, %19, %cst_17 [2] : vector<2x8x40xf32> to vector<2x8xf32>
    %c0_18 = arith.constant 0 : index
    %c0_19 = arith.constant 0 : index
    %21 = vector.load %arg6[%c0_18, %c0_19] : memref<1x1xf32, #tpu.memory_space<vmem>>, vector<1x1xf32>
    %22 = vector.broadcast %21 : vector<1x1xf32> to vector<2x8xf32>
    %23 = arith.addf %20, %22 : vector<2x8xf32>
    %cst_20 = arith.constant 1.000000e+00 : f32
    %24 = vector.broadcast %cst_20 : f32 to vector<2x8xf32>
    %25 = arith.mulf %23, %24 : vector<2x8xf32>
    %cst_21 = arith.constant dense<0xFF800000> : vector<2xf32>
    %26 = vector.multi_reduction <maximumf>, %25, %cst_21 [1] : vector<2x8xf32> to vector<2xf32>
    %27 = vector.shape_cast %26 : vector<2xf32> to vector<2x1xf32>
    %28 = vector.broadcast %27 : vector<2x1xf32> to vector<2x8xf32>
    %29 = arith.subf %25, %28 : vector<2x8xf32>
    %30 = math.exp %29 : vector<2x8xf32>
    %cst_22 = arith.constant dense<0.000000e+00> : vector<2xf32>
    %31 = vector.multi_reduction <add>, %30, %cst_22 [1] : vector<2x8xf32> to vector<2xf32>
    %32 = vector.shape_cast %31 : vector<2xf32> to vector<2x1xf32>
    %33 = vector.broadcast %32 : vector<2x1xf32> to vector<2x8xf32>
    %34 = arith.divf %30, %33 : vector<2x8xf32>
    %c0_23 = arith.constant 0 : index
    %c0_24 = arith.constant 0 : index
    %35 = vector.load %arg8[%c0_23, %c0_24] : memref<2x8xf32, #tpu.memory_space<vmem>>, vector<2x8xf32>
    tpu.vector_store %arg8[%c0_23, %c0_24], %34 {strides = array<i32>} : memref<2x8xf32, #tpu.memory_space<vmem>>, vector<2x8xf32>,
    return
  }
}

</mosaic_0001>

<llo_original>
// kernel: tpu_custom_call.1
$region0: #{tpu_custom_call.1}
  #allocation0 [shape = 'u32[]', space=smem, size = 0x4, offset = 0x4, fixed_abs, tag = 'smem constant byte address 0x4 - core index']
  #allocation1 [shape = 'u32[72,128]{1,0:T(1,128)}', space=vmem, size = 0x9000, scoped, tag = 'internal scratch']
  #allocation2 [shape = 'f32[1,1]{1,0:T(1,128)S(1)}', space=vmem, size = 0x200, scoped, tag = 'scoped memory for tpu_custom_call.1']
  %s0 = inlined_call_operand.vmem [shape: f32[2,8,64], index: 0, kind: input, shape index: {}]
  %s1 = inlined_call_operand.vmem [shape: f32[64,48], index: 1, kind: input, shape index: {}]
  %s2 = inlined_call_operand.vmem [shape: f32[1,48], index: 2, kind: input, shape index: {}]
  %s3 = inlined_call_operand.vmem [shape: f32[48,40], index: 3, kind: input, shape index: {}]
  %s4 = inlined_call_operand.vmem [shape: f32[1,40], index: 4, kind: input, shape index: {}]
  %s5 = inlined_call_operand.vmem [shape: f32[1,40], index: 5, kind: input, shape index: {}]
  %s6 = inlined_call_operand.<no memory space> [shape: f32[1,1], index: 6, kind: input, shape index: {}]
  %s7 = inlined_call_operand.hbm [shape: f32[2,8,40], index: 7, kind: output, shape index: {0}]
  %s8 = inlined_call_operand.hbm [shape: f32[2,8], index: 8, kind: output, shape index: {1}]
  %9 = xla_tuple %s7, %s8
  %s10 = sld [smem:[#allocation0]]
  $region46: #{tpu_custom_call.1} parent=0
    _
  %s12 = ssub.s32 1, %s10
  %s13 = scalar_select 0, %s12, %s10
  %v14 = vstv %s6
  %15 = vst [vmem:[#allocation2] sm:$0x1] %v14
  $region1: #{tpu_custom_call.1} parent=0
    #allocation3 [shape = 'u8[8192]{0}', space=vmem, size = 0x2000, scoped, tag = 'output window, operand 0, single buffered']
    #allocation4 [shape = 's32[1]{0}', space=sflag, size = 0x4, scoped, tag = 'scoped memory for tpu_custom_call.1']
    #allocation5 [shape = 'u8[1024]{0}', space=vmem, size = 0x400, scoped, tag = 'output window, operand 1, single buffered']
    #allocation6 [shape = 's32[1]{0}', space=sflag, size = 0x4, scoped, tag = 'scoped memory for tpu_custom_call.1']
    %16 = vsyncpa [#allocation4], 0
    %17 = vsyncpa [#allocation6], 0
    // Predicated region
    $region2: #{tpu_custom_call.1} parent=1 // pred_check
      _
    $region3: #{tpu_custom_call.1} parent=1 // pred_check_branch
      %19 = sbr.rel (0) target = $region5
    $region4: #{tpu_custom_call.1} parent=1 // pred_region
      _
    $region5: #{tpu_custom_call.1} parent=1 // pred_fallthru
      _
    // Predicated region
    $region6: #{tpu_custom_call.1} parent=1 // pred_check
      _
    $region7: #{tpu_custom_call.1} parent=1 // pred_check_branch
      %21 = sbr.rel (0) target = $region9
    $region8: #{tpu_custom_call.1} parent=1 // pred_region
      _
    $region9: #{tpu_custom_call.1} parent=1 // pred_fallthru
      _
    // Predicated region
    $region10: #{tpu_custom_call.1} parent=1 // pred_check
      _
    $region11: #{tpu_custom_call.1} parent=1 // pred_check_branch
      %23 = sbr.rel (0) target = $region13
    $region12: #{tpu_custom_call.1} parent=1 // pred_region
      _
    $region13: #{tpu_custom_call.1} parent=1 // pred_fallthru
      _
    // Predicated region
    $region14: #{tpu_custom_call.1} parent=1 // pred_check
      _
    $region15: #{tpu_custom_call.1} parent=1 // pred_check_branch
      %25 = sbr.rel (0) target = $region17
    $region16: #{tpu_custom_call.1} parent=1 // pred_region
      _
    $region17: #{tpu_custom_call.1} parent=1 // pred_fallthru
      _
    // Predicated region
    $region18: #{tpu_custom_call.1} parent=1 // pred_check
      _
    $region19: #{tpu_custom_call.1} parent=1 // pred_check_branch
      %27 = sbr.rel (0) target = $region21
    $region20: #{tpu_custom_call.1} parent=1 // pred_region
      _
    $region21: #{tpu_custom_call.1} parent=1 // pred_fallthru
      _
    // Predicated region
    $region22: #{tpu_custom_call.1} parent=1 // pred_check
      _
    $region23: #{tpu_custom_call.1} parent=1 // pred_check_branch
      %29 = sbr.rel (0) target = $region25
    $region24: #{tpu_custom_call.1} parent=1 // pred_region
      _
    $region25: #{tpu_custom_call.1} parent=1 // pred_fallthru
      _
    // Predicated region
    $region26: #{tpu_custom_call.1} parent=1 // pred_check
      _
    $region27: #{tpu_custom_call.1} parent=1 // pred_check_branch
      %31 = sbr.rel (0) target = $region29
    $region28: #{tpu_custom_call.1} parent=1 // pred_region
      _
    $region29: #{tpu_custom_call.1} parent=1 // pred_fallthru
      _
    %v32 = vld [vmem:[%s0] sm:$0xff]
    %v33 = vld [vmem:[%s0 + $0x8] sm:$0xff]
    %v34 = vld [vmem:[%s1] sm:$0xff]
    %v35 = vld [vmem:[%s1 + $0x8] sm:$0xff]
    %v36 = vld [vmem:[%s1 + $0x10] sm:$0xff]
    %v37 = vld [vmem:[%s1 + $0x18] sm:$0xff]
    %v38 = vld [vmem:[%s1 + $0x20] sm:$0xff]
    %v39 = vld [vmem:[%s1 + $0x28] sm:$0xff]
    %v40 = vld [vmem:[%s1 + $0x30] sm:$0xff]
    %v41 = vld [vmem:[%s1 + $0x38] sm:$0xff]
    %v42 = vld [vmem:[%s2] sm:$0x1]
    %v44 = vperm.slane %v42, 0
    %vm46 = vcmask 523264
    %v48 = vsel %vm46, %v32, 0
    %v51 = vsel %vm46, %v33, 0
    %53 = vmatpush.msra.mxu0 0.0
    %54 = vmatpush.msra.mxu0 0.0
    %55 = vmatpush.msra.mxu0 0.0
    %56 = vmatpush.msra.mxu0 0.0
    %57 = vmatpush.msra.mxu0 0.0
    %58 = vmatpush.msra.mxu0 0.0
    %59 = vmatpush.msra.mxu0 0.0
    %60 = vmatpush.msra.mxu0 0.0
    %61 = vmatpush.msra.mxu0 %v41
    %62 = vmatpush.msra.mxu0 %v40
    %63 = vmatpush.msra.mxu0 %v39
    %64 = vmatpush.msra.mxu0 %v38
    %65 = vmatpush.msra.mxu0 %v37
    %66 = vmatpush.msra.mxu0 %v36
    %67 = vmatpush.msra.mxu0 %v35
    %68 = vmatpush.msra.mxu0 %v34
    %69 = vmatmul.f32.gmra.mxu0 %v48
    %v70 = vpop.f32.mrf.mxu0
    %v71 = vadd.f32 %v44, %v70
    %72 = vmatmul.f32.gmra.mxu0 %v51
    %v73 = vpop.f32.mrf.mxu0
    %v74 = vadd.f32 %v44, %v73
    %75 = vdwg.mxu0
    %v76 = vmax.f32 %v71, 0.0
    %v77 = vmax.f32 %v74, 0.0
    %v78 = vld [vmem:[%s3] sm:$0xff]
    %v79 = vld [vmem:[%s3 + $0x8] sm:$0xff]
    %v80 = vld [vmem:[%s3 + $0x10] sm:$0xff]
    %v81 = vld [vmem:[%s3 + $0x18] sm:$0xff]
    %v82 = vld [vmem:[%s3 + $0x20] sm:$0xff]
    %v83 = vld [vmem:[%s3 + $0x28] sm:$0xff]
    %v84 = vld [vmem:[%s4] sm:$0x1]
    %v86 = vperm.slane %v84, 0
    %vm88 = vcmask 392192
    %v90 = vsel %vm88, %v76, 0
    %v93 = vsel %vm88, %v77, 0
    %95 = vmatpush.msra.mxu0 0.0
    %96 = vmatpush.msra.mxu0 0.0
    %97 = vmatpush.msra.mxu0 0.0
    %98 = vmatpush.msra.mxu0 0.0
    %99 = vmatpush.msra.mxu0 0.0
    %100 = vmatpush.msra.mxu0 0.0
    %101 = vmatpush.msra.mxu0 0.0
    %102 = vmatpush.msra.mxu0 0.0
    %103 = vmatpush.msra.mxu0 0.0
    %104 = vmatpush.msra.mxu0 0.0
    %105 = vmatpush.msra.mxu0 %v83
    %106 = vmatpush.msra.mxu0 %v82
    %107 = vmatpush.msra.mxu0 %v81
    %108 = vmatpush.msra.mxu0 %v80
    %109 = vmatpush.msra.mxu0 %v79
    %110 = vmatpush.msra.mxu0 %v78
    %111 = vmatmul.f32.gmra.mxu0 %v90
    %v112 = vpop.f32.mrf.mxu0
    %v113 = vadd.f32 %v86, %v112
    %114 = vmatmul.f32.gmra.mxu0 %v93
    %v115 = vpop.f32.mrf.mxu0
    %v116 = vadd.f32 %v86, %v115
    %117 = vdwg.mxu0
    %vm118 = vcmask 326656
    %119 = vst.msk [vmem:[#allocation3] sm:$0xff] %vm118, %v113
    %120 = vst.msk [vmem:[#allocation3 + $0x8] sm:$0xff] %vm118, %v116
    %v121 = vld [vmem:[%s5] sm:$0x1]
    %v123 = vperm.slane %v121, 0
    %v125 = vmul.f32 %v113, %v123
    %v126 = vmul.f32 %v116, %v123
    %v127 = vsel %vm118, %v125, 0.0
    %128 = vadd.xlane.f32.xlu0 %v127
    %v129 = vpop.xlane.xlu0 %128
    %v130 = vsel %vm118, %v126, 0.0
    %131 = vadd.xlane.f32.xlu0 %v130
    %v132 = vpop.xlane.xlu0 %131
    %v133 = vld [vmem:[#allocation2] sm:$0x1]
    %v135 = vperm.slane %v133, 0
    %136 = vset.pattern.permute.xlu0 0
    %137 = vperm.xlu0 %136, %v135
    %v138 = vpop.permute.xlu0 %137
    %v140 = vadd.f32 %v129, %v138
    %v141 = vadd.f32 %v132, %v138
    %v144 = vlaneseq
    %v145 = vand.u32 %v144, 127
    %v146 = vperm.slane %v140, %v145
    %v147 = vperm.slane %v141, %v145
    %vm148 = vcmask 1041409
    %v149 = vsel %vm148, %v147, %v146
    %vm151 = vcmask 58368
    %v152 = vsel %vm151, %v149, -inf
    %153 = vmax.xlane.f32.xlu0 %v152
    %v154 = vpop.xlane.xlu0 %153
    %v156 = vperm.slane %v154, 0
    %v157 = vperm.slane %v154, 1
    %v160 = vsub.f32 %v140, %v156
    %v161 = vsub.f32 %v141, %v157
    %v162 = vmul.f32 %v160, 1.442695
    %v163 = vpow.pop %v162
    %v164 = vmul.f32 %v161, 1.442695
    %v165 = vpow.pop %v164
    %168 = vset.pattern.permute.xlu0 0
    %169 = vperm.xlu0 %168, %v163
    %v170 = vpop.permute.xlu0 %169
    %171 = vset.pattern.permute.xlu0 0
    %172 = vperm.xlu0 %171, %v165
    %v173 = vpop.permute.xlu0 %172
    %v174 = vperm.slane %v170, %v145
    %v175 = vperm.slane %v173, %v145
    %v176 = vsel %vm148, %v175, %v174
    %v178 = vsel %vm151, %v176, 0.0
    %179 = vadd.xlane.f32.xlu0 %v178
    %v180 = vpop.xlane.xlu0 %179
    %v182 = vperm.slane %v180, 0
    %v183 = vperm.slane %v180, 1
    %v186 = vrcp.pop %v182
    %v187 = vmul.f32 %v182, %v186
    %v188 = vsub.f32 1.0, %v187
    %v189 = vmul.f32 %v186, %v188
    %v190 = vadd.f32 %v186, %v189
    %vm191 = vweird.f32 %v182
    %vm192 = vweird.f32 %v186
    %vm193 = vmor %vm191, %vm192
    %v194 = vsel %vm193, %v186, %v190
    %v195 = vand.u32 2147483647, %v182
    %vm196 = vcmp.eq.f32.partialorder %v195, 8.507059e+37
    %v197 = vand.u32 %v182, 2147483648
    %v198 = vor.u32 1.1754944e-38, %v197
    %v199 = vsel %vm196, %v198, %v194
    %v200 = vmul.f32 %v163, %v199
    %v201 = vrcp.pop %v183
    %v202 = vmul.f32 %v183, %v201
    %v203 = vsub.f32 1.0, %v202
    %v204 = vmul.f32 %v201, %v203
    %v205 = vadd.f32 %v201, %v204
    %vm206 = vweird.f32 %v183
    %vm207 = vweird.f32 %v201
    %vm208 = vmor %vm206, %vm207
    %v209 = vsel %vm208, %v201, %v205
    %v210 = vand.u32 2147483647, %v183
    %vm211 = vcmp.eq.f32.partialorder %v210, 8.507059e+37
    %v212 = vand.u32 %v183, 2147483648
    %v213 = vor.u32 1.1754944e-38, %v212
    %v214 = vsel %vm211, %v213, %v209
    %v215 = vmul.f32 %v165, %v214
    %218 = vset.pattern.permute.xlu0 0
    %219 = vperm.xlu0 %218, %v200
    %v220 = vpop.permute.xlu0 %219
    %221 = vset.pattern.permute.xlu0 0
    %222 = vperm.xlu0 %221, %v215
    %v223 = vpop.permute.xlu0 %222
    %v224 = vperm.slane %v220, %v145
    %v225 = vperm.slane %v223, %v145
    %v226 = vsel %vm148, %v225, %v224
    %228 = vst.msk [vmem:[#allocation5] sm:$0x3] %vm151, %v226
    // Predicated region
    $region30: #{tpu_custom_call.1} parent=1 // pred_check
      _
    $region31: #{tpu_custom_call.1} parent=1 // pred_check_branch
      %230 = sbr.rel (0) target = $region33
    $region32: #{tpu_custom_call.1} parent=1 // pred_region
      %232 = vsyncadd [#allocation4], 0
      %s233 = sshll.u32 [#allocation3], 4
      %s234 = int_to_ptr.vmem [resolvable:$true] %s233
      %s235 = sshll.u32 %s7, 4
      %s236 = int_to_ptr.hbm [resolvable:$true] %s235
      %241 = dma.vmem_to_hbm [thread:$0]  %s234, 256, %s236, [#allocation4], 128, 128, 8
    $region33: #{tpu_custom_call.1} parent=1 // pred_fallthru
      _
    // Predicated region
    $region34: #{tpu_custom_call.1} parent=1 // pred_check
      _
    $region35: #{tpu_custom_call.1} parent=1 // pred_check_branch
      %243 = sbr.rel (0) target = $region37
    $region36: #{tpu_custom_call.1} parent=1 // pred_region
      %245 = vsyncadd [#allocation6], 0
      %s247 = sshll.u32 [#allocation5], 4
      %s248 = int_to_ptr.vmem [resolvable:$true] %s247
      %s249 = sshll.u32 %s8, 4
      %s250 = int_to_ptr.hbm [resolvable:$true] %s249
      %252 = dma.vmem_to_hbm [thread:$0]  %s248, 32, %s250, [#allocation6]
    $region37: #{tpu_custom_call.1} parent=1 // pred_fallthru
      _
    // Predicated region
    $region38: #{tpu_custom_call.1} parent=1 // pred_check
      _
    $region39: #{tpu_custom_call.1} parent=1 // pred_check_branch
      %254 = sbr.rel (0) target = $region41
    $region40: #{tpu_custom_call.1} parent=1 // pred_region
      %256 = dma.done [#allocation4], 256
    $region41: #{tpu_custom_call.1} parent=1 // pred_fallthru
      _
    // Predicated region
    $region42: #{tpu_custom_call.1} parent=1 // pred_check
      _
    $region43: #{tpu_custom_call.1} parent=1 // pred_check_branch
      %258 = sbr.rel (0) target = $region45
    $region44: #{tpu_custom_call.1} parent=1 // pred_region
      %260 = dma.done [#allocation6], 32
    $region45: #{tpu_custom_call.1} parent=1 // pred_fallthru
      _
    %261 = vsyncpa [#allocation4], 1
    %262 = vsyncpa [#allocation6], 1

</llo_original>
